<compile_context>
chip_gen: v7x
topology: tpu7x:2x2x1
jax: 0.10.0
libtpu: 0.0.40
codegen_flags: <defaults>
</compile_context>

<pallas_src>
import functools

import jax
import jax.numpy as jnp
from jax import lax
from jax.experimental import pallas as pl
from jax.experimental.pallas import tpu as pltpu


def _round_up(x, m):
    return ((x + m - 1) // m) * m


def _residual_kernel(x_ref, w3_ref, w1_ref, mask_ref, out_ref,
                     ppad_ref, patch_ref, y_ref, *, H, W, Cin, Cin_pad, pad):
    """One grid step = `bt` images, one pair of batched MXU matmuls.

    x_ref:     (bt, Cin, H*W)              f32  input block (channels on sublanes, HW on lanes)
    w3_ref:    (Hid, 9*Cin_pad)            md   3x3 weight, taps folded into K, channel-padded
    w1_ref:    (Cout, Hid)                 md   1x1 weight
    mask_ref:  (9, bt*H*W)                 md   per-tap {0,1} validity masks
    out_ref:   (bt, Cout, H*W)             f32
    ppad_ref:  (Cin_pad, pad+bt*H*W+pad)   md   relu(x) slab, images back to back, zero halos
    patch_ref: (9*Cin_pad, bt*H*W)         md   im2col patch matrix (lane-dense, aligned rows)
    y_ref:     (Cout, bt*H*W)              f32  conv1x1 output staging for the residual store
    """
    bt = x_ref.shape[0]
    HW = H * W
    ncol = bt * HW
    md = ppad_ref.dtype

    # --- once per step: zero only the halo columns + channel-pad rows (NOT the full slab).
    # Must run every step (scratch is uninitialized and, under dimension_semantics=
    # ("parallel",), the second core never executes step 0).
    ppad_ref[:, 0:pad] = jnp.zeros((Cin_pad, pad), md)
    ppad_ref[:, pad + ncol:] = jnp.zeros((Cin_pad, pad), md)
    if Cin_pad > Cin:
        ppad_ref[Cin:, :] = jnp.zeros((Cin_pad - Cin, pad + ncol + pad), md)

    lane_mult = 128 if HW % 128 == 0 else 1

    def _hint(idx):
        # Alignment hint for dynamic lane offsets (only meaningful in the fori_loop path).
        if isinstance(idx, int) or lane_mult == 1:
            return idx
        return pl.multiple_of(idx, lane_mult)

    def _for_each(n, body):
        # Static unroll for small blocks; bounded fori_loop for large ones so the 64-vreg
        # file is not blown up by dozens of unrolled per-image temporaries.
        if n <= 8:
            for i in range(n):
                body(i)
        else:
            def _step(i, carry):
                body(i)
                return carry
            lax.fori_loop(0, n, _step, 0)

    # --- per image: ReLU + cast, one lane-aligned store into the shared flat slab.
    def _fill(i):
        ppad_ref[0:Cin, pl.ds(_hint(pad + i * HW), HW)] = (
            jnp.maximum(x_ref[i], 0.0).astype(md))
    _for_each(bt, _fill)

    # --- batched im2col: 9 shifted full-width views -> dense, sublane/lane-aligned stores.
    # The per-tap masks zero every read that falls outside its own image (top/bottom rows,
    # row-wrapped left/right columns and image-to-image boundaries inside the slab).
    for t in range(9):
        dy, dx = t // 3, t % 3
        off = pad + (dy - 1) * W + (dx - 1)
        tap = ppad_ref[:, off:off + ncol]                       # (Cin_pad, ncol)
        if t != 4:                                              # center tap is always valid
            tap = tap * mask_ref[t:t + 1, :]
        patch_ref[t * Cin_pad:(t + 1) * Cin_pad, :] = tap

    # --- conv3x3 + ReLU + conv1x1 as two batched MXU matmuls, N = bt*HW lanes, f32 accum.
    h = jnp.dot(w3_ref[...], patch_ref[...],
                preferred_element_type=jnp.float32)             # (Hid, ncol) f32
    h = jnp.maximum(h, 0.0).astype(w1_ref.dtype)
    y_ref[...] = jnp.dot(w1_ref[...], h,
                         preferred_element_type=jnp.float32)    # (Cout, ncol) f32

    # --- per image: residual add with the raw (un-activated) input, lane-dense store.
    def _store(i):
        out_ref[i] = (y_ref[:, pl.ds(_hint(i * HW), HW)]
                      + x_ref[i]).astype(out_ref.dtype)
    _for_each(bt, _store)


def residual_layer(x_nchw, w3_oihw, w1_oihw, *,
                   matmul_dtype=jnp.bfloat16, block_batch=None):
    """ResidualLayer forward: x + conv1x1(relu(conv3x3(relu(x)))).

    x_nchw:  (B, Cin, H, W)      float32
    w3_oihw: (Hid, Cin, 3, 3)    float32 (PyTorch OIHW, bias=False)
    w1_oihw: (Cout, Hid, 1, 1)   float32
    matmul_dtype: MXU operand dtype. bfloat16 (default) is the native fast path on v5e, v6e
                  and v7x; accumulation, ReLUs and the residual add always stay float32.
                  Pass jnp.float32 for bit-accurate f32 semantics.
    returns: (B, Cout, H, W)     float32
    """
    B, Cin, H, W = x_nchw.shape
    Hid = w3_oihw.shape[0]
    Cout = w1_oihw.shape[0]
    assert Cout == Cin, "residual add requires out_channels == in_channels"
    assert w3_oihw.shape == (Hid, Cin, 3, 3)
    assert w1_oihw.shape == (Cout, Hid, 1, 1)
    HW = H * W

    itemsize = jnp.dtype(matmul_dtype).itemsize
    sub = 8 * (4 // itemsize)                 # sublane granularity of the patch dtype
    Cin_pad = _round_up(Cin, sub)             # tap rows start on vreg-group boundaries
    pad = _round_up(W + 1, 128)               # 128-lane-aligned zero halos (covers dy/dx shifts)

    # ---- images per grid step: VMEM-budgeted (safe on v7x's 64 MiB), >=2 grid steps for
    # megacore / dual-TC sharding, and a divisor of B.
    bytes_per_img = (2 * (Cin + Cout) * HW * 4          # double-buffered in + out blocks
                     + Cin_pad * HW * itemsize          # slab interior share
                     + 9 * Cin_pad * HW * itemsize      # patch columns
                     + Cout * HW * 4                    # y staging
                     + Hid * HW * 4)                    # live f32 conv3x3 result
    if block_batch is not None:
        bt = max(1, min(int(block_batch), B))
    else:
        budget = 24 << 20
        bt = max(1, min(B, budget // max(1, bytes_per_img)))
        if B >= 2:
            bt = min(bt, B // 2)              # keep >= 2 grid steps (v7x has 2 TensorCores)
    while B % bt != 0:
        bt -= 1
    ncol = bt * HW

    # ---- operand packing (all cheap, done once in HBM).
    x = x_nchw.reshape(B, Cin, HW)            # free reshape of NCHW, no transpose / pad copy
    # 3x3 weight -> (Hid, 9*Cin_pad): column = (dy*3+dx)*Cin_pad + c, zero-padded channels.
    w3 = jnp.transpose(w3_oihw, (0, 2, 3, 1))                       # (Hid, 3, 3, Cin)
    w3 = jnp.pad(w3, ((0, 0), (0, 0), (0, 0), (0, Cin_pad - Cin)))  # (Hid, 3, 3, Cin_pad)
    w3 = w3.reshape(Hid, 9 * Cin_pad).astype(matmul_dtype)
    w1 = w1_oihw[:, :, 0, 0].astype(matmul_dtype)                   # (Cout, Hid)

    # Per-tap {0,1} validity masks over the batched flat layout (vertical + horizontal).
    q = jnp.arange(ncol, dtype=jnp.int32)
    py = (q % HW) // W
    px = q % W
    masks = []
    for dy in range(3):
        for dx in range(3):
            ok_y = (py + dy - 1 >= 0) & (py + dy - 1 < H)
            ok_x = (px + dx - 1 >= 0) & (px + dx - 1 < W)
            masks.append(ok_y & ok_x)
    mask = jnp.stack(masks).astype(matmul_dtype)                    # (9, ncol)

    # ---- VMEM limit: scoped defaults (16/32 MiB) are far below physical; ask for what we use.
    scratch_bytes = (Cin_pad * (2 * pad + ncol) * itemsize
                     + 9 * Cin_pad * ncol * itemsize
                     + Cout * ncol * 4)
    block_bytes = 2 * bt * (Cin + Cout) * HW * 4
    weight_bytes = (Hid * 9 * Cin_pad + Cout * Hid + 9 * ncol) * itemsize * 2
    vmem_limit = int(min(max(2 * (scratch_bytes + block_bytes + weight_bytes) + (2 << 20),
                             16 << 20), 50 << 20))

    kernel = functools.partial(_residual_kernel, H=H, W=W,
                               Cin=Cin, Cin_pad=Cin_pad, pad=pad)
    out = pl.pallas_call(
        kernel,
        out_shape=jax.ShapeDtypeStruct((B, Cout, HW), x_nchw.dtype),
        grid_spec=pltpu.PrefetchScalarGridSpec(
            num_scalar_prefetch=0,
            grid=(B // bt,),
            in_specs=[
                pl.BlockSpec((bt, Cin, HW), lambda b: (b, 0, 0)),
                pl.BlockSpec((Hid, 9 * Cin_pad), lambda b: (0, 0)),
                pl.BlockSpec((Cout, Hid), lambda b: (0, 0)),
                pl.BlockSpec((9, ncol), lambda b: (0, 0)),
            ],
            out_specs=pl.BlockSpec((bt, Cout, HW), lambda b: (b, 0, 0)),
            scratch_shapes=[
                pltpu.VMEM((Cin_pad, pad + ncol + pad), matmul_dtype),  # relu(x) slab + halos
                pltpu.VMEM((9 * Cin_pad, ncol), matmul_dtype),          # im2col patch matrix
                pltpu.VMEM((Cout, ncol), jnp.float32),                  # conv1x1 output staging
            ],
        ),
        compiler_params=pltpu.CompilerParams(
            dimension_semantics=("parallel",),
            vmem_limit_bytes=vmem_limit),
    )(x, w3, w1, mask)

    return out.reshape(B, Cout, H, W)


def _reference(x_nchw, w3_oihw, w1_oihw):
    """Pure-JAX NCHW reference mirroring the PyTorch module."""
    a = jnp.maximum(x_nchw, 0.0)
    h = lax.conv_general_dilated(
        a, w3_oihw, window_strides=(1, 1), padding=((1, 1), (1, 1)),
        dimension_numbers=("NCHW", "OIHW", "NCHW"))
    h = jnp.maximum(h, 0.0)
    y = lax.conv_general_dilated(
        h, w1_oihw, window_strides=(1, 1), padding=((0, 0), (0, 0)),
        dimension_numbers=("NCHW", "OIHW", "NCHW"))
    return y + x_nchw


if __name__ == "__main__":
    B, C, H, W = 2, 4, 16, 16
    HIDDEN = 32

    key = jax.random.PRNGKey(0)
    kx, k3, k1 = jax.random.split(key, 3)

    x = jax.random.normal(kx, (B, C, H, W), dtype=jnp.float32)
    # Deterministic synthetic weights (PyTorch OIHW conv layout, bias=False)
    w3 = jax.random.normal(k3, (HIDDEN, C, 3, 3), dtype=jnp.float32) * 0.1
    w1 = jax.random.normal(k1, (C, HIDDEN, 1, 1), dtype=jnp.float32) * 0.1

    ref = _reference(x, w3, w1)

    # Exact f32 path (matches PyTorch f32 semantics).
    out_f32 = jax.block_until_ready(
        residual_layer(x, w3, w1, matmul_dtype=jnp.float32))
    assert out_f32.shape == (B, C, H, W)
    assert jnp.allclose(out_f32, ref, atol=1e-4, rtol=1e-4)

    # Default bf16 MXU-operand path (native fast path on v5e/v6e/v7x; f32 accumulation,
    # ReLU and the residual add stay f32, so only the conv inputs/weights are rounded).
    out_bf16 = jax.block_until_ready(residual_layer(x, w3, w1))
    assert out_bf16.shape == (B, C, H, W)
    assert jnp.allclose(out_bf16, ref, atol=5e-2, rtol=5e-2)

    print("KERNEL_OK")
</pallas_src>

<mosaic_0001>
module attributes {stable_mosaic.version = 11 : i64} {
  func.func @_residual_kernel(%arg0: i32, %arg1: memref<1x4x256xf32, #tpu.memory_space<vmem>>, %arg2: memref<32x72xf32, #tpu.memory_space<vmem>>, %arg3: memref<4x32xf32, #tpu.memory_space<vmem>>, %arg4: memref<9x256xf32, #tpu.memory_space<vmem>>, %arg5: memref<1x4x256xf32, #tpu.memory_space<vmem>>, %arg6: memref<8x512xf32, #tpu.memory_space<vmem>>, %arg7: memref<72x256xf32, #tpu.memory_space<vmem>>, %arg8: memref<4x256xf32, #tpu.memory_space<vmem>>) attributes {dimension_semantics = [#tpu.dimension_semantics<parallel>], iteration_bounds = array<i64: 2>, scalar_prefetch = 0 : i64, scratch_operands = 3 : i64, tpu.core_type = #tpu.core_type<tc>, window_params = [{transform_indices = @transform_0, window_bounds = array<i64: 1, 4, 256>}, {pipeline_mode = #tpu.pipeline_mode<synchronous>, transform_indices = @transform_1, window_bounds = array<i64: 32, 72>}, {pipeline_mode = #tpu.pipeline_mode<synchronous>, transform_indices = @transform_2, window_bounds = array<i64: 4, 32>}, {pipeline_mode = #tpu.pipeline_mode<synchronous>, transform_indices = @transform_3, window_bounds = array<i64: 9, 256>}, {transform_indices = @transform_4, window_bounds = array<i64: 1, 4, 256>}]} {
    %cst = arith.constant 0.000000e+00 : f32
    %0 = vector.broadcast %cst : f32 to vector<8x128xf32>
    %c0 = arith.constant 0 : index
    %c0_0 = arith.constant 0 : index
    %1 = vector.load %arg6[%c0, %c0_0] : memref<8x512xf32, #tpu.memory_space<vmem>>, vector<8x128xf32>
    tpu.vector_store %arg6[%c0, %c0_0], %0 {strides = array<i32>} : memref<8x512xf32, #tpu.memory_space<vmem>>, vector<8x128xf32>,
    %cst_1 = arith.constant 0.000000e+00 : f32
    %2 = vector.broadcast %cst_1 : f32 to vector<8x128xf32>
    %c0_2 = arith.constant 0 : index
    %c384 = arith.constant 384 : index
    %3 = vector.load %arg6[%c0_2, %c384] : memref<8x512xf32, #tpu.memory_space<vmem>>, vector<8x128xf32>
    tpu.vector_store %arg6[%c0_2, %c384], %2 {strides = array<i32>} : memref<8x512xf32, #tpu.memory_space<vmem>>, vector<8x128xf32>,
    %cst_3 = arith.constant 0.000000e+00 : f32
    %4 = vector.broadcast %cst_3 : f32 to vector<4x512xf32>
    %c4 = arith.constant 4 : index
    %c0_4 = arith.constant 0 : index
    %5 = vector.load %arg6[%c4, %c0_4] : memref<8x512xf32, #tpu.memory_space<vmem>>, vector<4x512xf32>
    tpu.vector_store %arg6[%c4, %c0_4], %4 {strides = array<i32>} : memref<8x512xf32, #tpu.memory_space<vmem>>, vector<4x512xf32>,
    %c0_5 = arith.constant 0 : index
    %c0_6 = arith.constant 0 : index
    %c0_7 = arith.constant 0 : index
    %6 = vector.load %arg1[%c0_5, %c0_6, %c0_7] : memref<1x4x256xf32, #tpu.memory_space<vmem>>, vector<1x4x256xf32>
    %7 = vector.shape_cast %6 : vector<1x4x256xf32> to vector<4x256xf32>
    %cst_8 = arith.constant 0.000000e+00 : f32
    %8 = vector.broadcast %cst_8 : f32 to vector<4x256xf32>
    %9 = arith.maximumf %7, %8 : vector<4x256xf32>
    %c0_9 = arith.constant 0 : index
    %c128 = arith.constant 128 : index
    %10 = vector.load %arg6[%c0_9, %c128] : memref<8x512xf32, #tpu.memory_space<vmem>>, vector<4x256xf32>
    tpu.vector_store %arg6[%c0_9, %c128], %9 {strides = array<i32>} : memref<8x512xf32, #tpu.memory_space<vmem>>, vector<4x256xf32>,
    %c0_10 = arith.constant 0 : index
    %c111 = arith.constant 111 : index
    %11 = vector.load %arg6[%c0_10, %c111] : memref<8x512xf32, #tpu.memory_space<vmem>>, vector<8x256xf32>
    %c0_11 = arith.constant 0 : index
    %c0_12 = arith.constant 0 : index
    %12 = vector.load %arg4[%c0_11, %c0_12] : memref<9x256xf32, #tpu.memory_space<vmem>>, vector<1x256xf32>
    %13 = vector.broadcast %12 : vector<1x256xf32> to vector<8x256xf32>
    %14 = arith.mulf %11, %13 : vector<8x256xf32>
    %c0_13 = arith.constant 0 : index
    %c0_14 = arith.constant 0 : index
    %15 = vector.load %arg7[%c0_13, %c0_14] : memref<72x256xf32, #tpu.memory_space<vmem>>, vector<8x256xf32>
    tpu.vector_store %arg7[%c0_13, %c0_14], %14 {strides = array<i32>} : memref<72x256xf32, #tpu.memory_space<vmem>>, vector<8x256xf32>,
    %c0_15 = arith.constant 0 : index
    %c112 = arith.constant 112 : index
    %16 = vector.load %arg6[%c0_15, %c112] : memref<8x512xf32, #tpu.memory_space<vmem>>, vector<8x256xf32>
    %c1 = arith.constant 1 : index
    %c0_16 = arith.constant 0 : index
    %17 = vector.load %arg4[%c1, %c0_16] : memref<9x256xf32, #tpu.memory_space<vmem>>, vector<1x256xf32>
    %18 = vector.broadcast %17 : vector<1x256xf32> to vector<8x256xf32>
    %19 = arith.mulf %16, %18 : vector<8x256xf32>
    %c8 = arith.constant 8 : index
    %c0_17 = arith.constant 0 : index
    %20 = vector.load %arg7[%c8, %c0_17] : memref<72x256xf32, #tpu.memory_space<vmem>>, vector<8x256xf32>
    tpu.vector_store %arg7[%c8, %c0_17], %19 {strides = array<i32>} : memref<72x256xf32, #tpu.memory_space<vmem>>, vector<8x256xf32>,
    %c0_18 = arith.constant 0 : index
    %c113 = arith.constant 113 : index
    %21 = vector.load %arg6[%c0_18, %c113] : memref<8x512xf32, #tpu.memory_space<vmem>>, vector<8x256xf32>
    %c2 = arith.constant 2 : index
    %c0_19 = arith.constant 0 : index
    %22 = vector.load %arg4[%c2, %c0_19] : memref<9x256xf32, #tpu.memory_space<vmem>>, vector<1x256xf32>
    %23 = vector.broadcast %22 : vector<1x256xf32> to vector<8x256xf32>
    %24 = arith.mulf %21, %23 : vector<8x256xf32>
    %c16 = arith.constant 16 : index
    %c0_20 = arith.constant 0 : index
    %25 = vector.load %arg7[%c16, %c0_20] : memref<72x256xf32, #tpu.memory_space<vmem>>, vector<8x256xf32>
    tpu.vector_store %arg7[%c16, %c0_20], %24 {strides = array<i32>} : memref<72x256xf32, #tpu.memory_space<vmem>>, vector<8x256xf32>,
    %c0_21 = arith.constant 0 : index
    %c127 = arith.constant 127 : index
    %26 = vector.load %arg6[%c0_21, %c127] : memref<8x512xf32, #tpu.memory_space<vmem>>, vector<8x256xf32>
    %c3 = arith.constant 3 : index
    %c0_22 = arith.constant 0 : index
    %27 = vector.load %arg4[%c3, %c0_22] : memref<9x256xf32, #tpu.memory_space<vmem>>, vector<1x256xf32>
    %28 = vector.broadcast %27 : vector<1x256xf32> to vector<8x256xf32>
    %29 = arith.mulf %26, %28 : vector<8x256xf32>
    %c24 = arith.constant 24 : index
    %c0_23 = arith.constant 0 : index
    %30 = vector.load %arg7[%c24, %c0_23] : memref<72x256xf32, #tpu.memory_space<vmem>>, vector<8x256xf32>
    tpu.vector_store %arg7[%c24, %c0_23], %29 {strides = array<i32>} : memref<72x256xf32, #tpu.memory_space<vmem>>, vector<8x256xf32>,
    %c0_24 = arith.constant 0 : index
    %c128_25 = arith.constant 128 : index
    %31 = vector.load %arg6[%c0_24, %c128_25] : memref<8x512xf32, #tpu.memory_space<vmem>>, vector<8x256xf32>
    %c32 = arith.constant 32 : index
    %c0_26 = arith.constant 0 : index
    %32 = vector.load %arg7[%c32, %c0_26] : memref<72x256xf32, #tpu.memory_space<vmem>>, vector<8x256xf32>
    tpu.vector_store %arg7[%c32, %c0_26], %31 {strides = array<i32>} : memref<72x256xf32, #tpu.memory_space<vmem>>, vector<8x256xf32>,
    %c0_27 = arith.constant 0 : index
    %c129 = arith.constant 129 : index
    %33 = vector.load %arg6[%c0_27, %c129] : memref<8x512xf32, #tpu.memory_space<vmem>>, vector<8x256xf32>
    %c5 = arith.constant 5 : index
    %c0_28 = arith.constant 0 : index
    %34 = vector.load %arg4[%c5, %c0_28] : memref<9x256xf32, #tpu.memory_space<vmem>>, vector<1x256xf32>
    %35 = vector.broadcast %34 : vector<1x256xf32> to vector<8x256xf32>
    %36 = arith.mulf %33, %35 : vector<8x256xf32>
    %c40 = arith.constant 40 : index
    %c0_29 = arith.constant 0 : index
    %37 = vector.load %arg7[%c40, %c0_29] : memref<72x256xf32, #tpu.memory_space<vmem>>, vector<8x256xf32>
    tpu.vector_store %arg7[%c40, %c0_29], %36 {strides = array<i32>} : memref<72x256xf32, #tpu.memory_space<vmem>>, vector<8x256xf32>,
    %c0_30 = arith.constant 0 : index
    %c143 = arith.constant 143 : index
    %38 = vector.load %arg6[%c0_30, %c143] : memref<8x512xf32, #tpu.memory_space<vmem>>, vector<8x256xf32>
    %c6 = arith.constant 6 : index
    %c0_31 = arith.constant 0 : index
    %39 = vector.load %arg4[%c6, %c0_31] : memref<9x256xf32, #tpu.memory_space<vmem>>, vector<1x256xf32>
    %40 = vector.broadcast %39 : vector<1x256xf32> to vector<8x256xf32>
    %41 = arith.mulf %38, %40 : vector<8x256xf32>
    %c48 = arith.constant 48 : index
    %c0_32 = arith.constant 0 : index
    %42 = vector.load %arg7[%c48, %c0_32] : memref<72x256xf32, #tpu.memory_space<vmem>>, vector<8x256xf32>
    tpu.vector_store %arg7[%c48, %c0_32], %41 {strides = array<i32>} : memref<72x256xf32, #tpu.memory_space<vmem>>, vector<8x256xf32>,
    %c0_33 = arith.constant 0 : index
    %c144 = arith.constant 144 : index
    %43 = vector.load %arg6[%c0_33, %c144] : memref<8x512xf32, #tpu.memory_space<vmem>>, vector<8x256xf32>
    %c7 = arith.constant 7 : index
    %c0_34 = arith.constant 0 : index
    %44 = vector.load %arg4[%c7, %c0_34] : memref<9x256xf32, #tpu.memory_space<vmem>>, vector<1x256xf32>
    %45 = vector.broadcast %44 : vector<1x256xf32> to vector<8x256xf32>
    %46 = arith.mulf %43, %45 : vector<8x256xf32>
    %c56 = arith.constant 56 : index
    %c0_35 = arith.constant 0 : index
    %47 = vector.load %arg7[%c56, %c0_35] : memref<72x256xf32, #tpu.memory_space<vmem>>, vector<8x256xf32>
    tpu.vector_store %arg7[%c56, %c0_35], %46 {strides = array<i32>} : memref<72x256xf32, #tpu.memory_space<vmem>>, vector<8x256xf32>,
    %c0_36 = arith.constant 0 : index
    %c145 = arith.constant 145 : index
    %48 = vector.load %arg6[%c0_36, %c145] : memref<8x512xf32, #tpu.memory_space<vmem>>, vector<8x256xf32>
    %c8_37 = arith.constant 8 : index
    %c0_38 = arith.constant 0 : index
    %49 = vector.load %arg4[%c8_37, %c0_38] : memref<9x256xf32, #tpu.memory_space<vmem>>, vector<1x256xf32>
    %50 = vector.broadcast %49 : vector<1x256xf32> to vector<8x256xf32>
    %51 = arith.mulf %48, %50 : vector<8x256xf32>
    %c64 = arith.constant 64 : index
    %c0_39 = arith.constant 0 : index
    %52 = vector.load %arg7[%c64, %c0_39] : memref<72x256xf32, #tpu.memory_space<vmem>>, vector<8x256xf32>
    tpu.vector_store %arg7[%c64, %c0_39], %51 {strides = array<i32>} : memref<72x256xf32, #tpu.memory_space<vmem>>, vector<8x256xf32>,
    %c0_40 = arith.constant 0 : index
    %c0_41 = arith.constant 0 : index
    %53 = vector.load %arg2[%c0_40, %c0_41] : memref<32x72xf32, #tpu.memory_space<vmem>>, vector<32x72xf32>
    %c0_42 = arith.constant 0 : index
    %c0_43 = arith.constant 0 : index
    %54 = vector.load %arg7[%c0_42, %c0_43] : memref<72x256xf32, #tpu.memory_space<vmem>>, vector<72x256xf32>
    %cst_44 = arith.constant dense<0.000000e+00> : vector<32x256xf32>
    %55 = tpu.matmul %53, %54, %cst_44 {dimension_numbers = #tpu.dot_dimension_numbers<[1], [0], [0], [1], [0, 0, 1, 1], [], []>} : vector<32x72xf32>, vector<72x256xf32>, vector<32x256xf32> -> vector<32x256xf32>
    %cst_45 = arith.constant 0.000000e+00 : f32
    %56 = vector.broadcast %cst_45 : f32 to vector<32x256xf32>
    %57 = arith.maximumf %55, %56 : vector<32x256xf32>
    %c0_46 = arith.constant 0 : index
    %c0_47 = arith.constant 0 : index
    %58 = vector.load %arg3[%c0_46, %c0_47] : memref<4x32xf32, #tpu.memory_space<vmem>>, vector<4x32xf32>
    %cst_48 = arith.constant dense<0.000000e+00> : vector<4x256xf32>
    %59 = tpu.matmul %58, %57, %cst_48 {dimension_numbers = #tpu.dot_dimension_numbers<[1], [0], [0], [1], [0, 0, 1, 1], [], []>} : vector<4x32xf32>, vector<32x256xf32>, vector<4x256xf32> -> vector<4x256xf32>
    %c0_49 = arith.constant 0 : index
    %c0_50 = arith.constant 0 : index
    %60 = vector.load %arg8[%c0_49, %c0_50] : memref<4x256xf32, #tpu.memory_space<vmem>>, vector<4x256xf32>
    tpu.vector_store %arg8[%c0_49, %c0_50], %59 {strides = array<i32>} : memref<4x256xf32, #tpu.memory_space<vmem>>, vector<4x256xf32>,
    %c0_51 = arith.constant 0 : index
    %c0_52 = arith.constant 0 : index
    %61 = vector.load %arg8[%c0_51, %c0_52] : memref<4x256xf32, #tpu.memory_space<vmem>>, vector<4x256xf32>
    %c0_53 = arith.constant 0 : index
    %c0_54 = arith.constant 0 : index
    %c0_55 = arith.constant 0 : index
    %62 = vector.load %arg1[%c0_53, %c0_54, %c0_55] : memref<1x4x256xf32, #tpu.memory_space<vmem>>, vector<1x4x256xf32>
    %63 = vector.shape_cast %62 : vector<1x4x256xf32> to vector<4x256xf32>
    %64 = arith.addf %61, %63 : vector<4x256xf32>
    %c0_56 = arith.constant 0 : index
    %c0_57 = arith.constant 0 : index
    %c0_58 = arith.constant 0 : index
    %65 = vector.load %arg5[%c0_56, %c0_57, %c0_58] : memref<1x4x256xf32, #tpu.memory_space<vmem>>, vector<1x4x256xf32>
    %66 = vector.shape_cast %65 : vector<1x4x256xf32> to vector<4x256xf32>
    %67 = vector.shape_cast %64 : vector<4x256xf32> to vector<1x4x256xf32>
    tpu.vector_store %arg5[%c0_56, %c0_57, %c0_58], %67 {strides = array<i32>} : memref<1x4x256xf32, #tpu.memory_space<vmem>>, vector<1x4x256xf32>,
    return
  }
  func.func @transform_0(%arg0: i32) -> (i32, i32, i32) {
    %c0_i32 = arith.constant 0 : i32
    %c0_i32_0 = arith.constant 0 : i32
    %c0_i32_1 = arith.constant 0 : i32
    return %arg0, %c0_i32, %c0_i32_0 : i32, i32, i32
  }
  func.func @transform_1(%arg0: i32) -> (i32, i32) {
    %c0_i32 = arith.constant 0 : i32
    %c0_i32_0 = arith.constant 0 : i32
    %c0_i32_1 = arith.constant 0 : i32
    return %c0_i32, %c0_i32_0 : i32, i32
  }
  func.func @transform_2(%arg0: i32) -> (i32, i32) {
    %c0_i32 = arith.constant 0 : i32
    %c0_i32_0 = arith.constant 0 : i32
    %c0_i32_1 = arith.constant 0 : i32
    return %c0_i32, %c0_i32_0 : i32, i32
  }
  func.func @transform_3(%arg0: i32) -> (i32, i32) {
    %c0_i32 = arith.constant 0 : i32
    %c0_i32_0 = arith.constant 0 : i32
    %c0_i32_1 = arith.constant 0 : i32
    return %c0_i32, %c0_i32_0 : i32, i32
  }
  func.func @transform_4(%arg0: i32) -> (i32, i32, i32) {
    %c0_i32 = arith.constant 0 : i32
    %c0_i32_0 = arith.constant 0 : i32
    %c0_i32_1 = arith.constant 0 : i32
    return %arg0, %c0_i32, %c0_i32_0 : i32, i32, i32
  }
}

</mosaic_0001>

<llo_original>
// kernel: tpu_custom_call.1
$region0: #{tpu_custom_call.1}
  #allocation0 [shape = 'u32[]', space=smem, size = 0x4, offset = 0x4, fixed_abs, tag = 'smem constant byte address 0x4 - core index']
  #allocation1 [shape = 'u32[144,128]{1,0:T(1,128)}', space=vmem, size = 0x12000, scoped, tag = 'internal scratch']
  #allocation2 [shape = 'f32[8,512]{1,0:T(8,128)}', space=vmem, size = 0x4000, scoped, tag = 'scratch operand']
  #allocation3 [shape = 'f32[72,256]{1,0:T(8,128)}', space=vmem, size = 0x12000, scoped, tag = 'scratch operand']
  #allocation4 [shape = 'f32[4,256]{1,0:T(4,128)}', space=vmem, size = 0x1000, scoped, tag = 'scratch operand']
  %s0 = inlined_call_operand.hbm [shape: f32[2,4,256], index: 0, kind: input, shape index: {}]
  %s1 = inlined_call_operand.hbm [shape: f32[32,72], index: 1, kind: input, shape index: {}]
  %s2 = inlined_call_operand.vmem [shape: f32[4,32], index: 2, kind: input, shape index: {}]
  %s3 = inlined_call_operand.hbm [shape: f32[9,256], index: 3, kind: input, shape index: {}]
  %s4 = inlined_call_operand.hbm [shape: f32[2,4,256], index: 4, kind: output, shape index: {}]
  %s5 = sld [smem:[#allocation0]]
  $region61: #{tpu_custom_call.1} parent=0
    _
  %s7 = ssub.s32 1, %s5
  %s8 = scalar_select 0, %s7, %s5
  $region1: #{tpu_custom_call.1} parent=0
    #allocation5 [shape = 'u8[8192]{0}', space=vmem, size = 0x2000, scoped, tag = 'input window, operand 0']
    #allocation6 [shape = 's32[2]{0}', space=sflag, size = 0x8, scoped, tag = 'scoped memory for tpu_custom_call.1']
    #allocation7 [shape = 's32[2]{0}', space=sflag, size = 0x8, scoped, tag = 'scoped memory for tpu_custom_call.1']
    #allocation8 [shape = 'u8[16384]{0}', space=vmem, size = 0x4000, scoped, tag = 'input window, operand 1, single buffered']
    #allocation9 [shape = 's32[1]{0}', space=sflag, size = 0x4, scoped, tag = 'scoped memory for tpu_custom_call.1']
    #allocation10 [shape = 'u8[16384]{0}', space=vmem, size = 0x4000, scoped, tag = 'input window, operand 3, single buffered']
    #allocation11 [shape = 'u8[8192]{0}', space=vmem, size = 0x2000, scoped, tag = 'output window, operand 0']
    %9 = vsyncpa [#allocation6], 0
    %s10 = scalar_lea.sflag [#allocation6], 1
    %11 = vsyncpa %s10, 0
    %12 = vsyncpa [#allocation9], 0
    %13 = vsyncpa [#allocation7], 0
    %s14 = scalar_lea.sflag [#allocation7], 1
    %15 = vsyncpa %s14, 0
    loop: start=0, step=1, limit=4
    $region2: #{tpu_custom_call.1} parent=1 // loop_pre_header
      _
    $region3: #{tpu_custom_call.1} parent=1 // loop_header
      %s17 = sphi 0, %s21
      %p18 = scmp.ge.s32.totalorder %s17, 4
      %s27 = sphi 0, %s29
      %s30 = sphi 0, %s27
      %s31 = sphi 0, %s30
      %s47 = sphi 0, %s31
      %s51 = sphi 0, %s51
      %s53 = sphi 0, %s51
      %s54 = sphi 0, %s53
      %s68 = sphi 0, %s54
      %s72 = sphi 0, %s72
      %s74 = sphi 0, %s72
      %s75 = sphi 0, %s74
      %s89 = sphi 0, %s75
      %s93 = sphi 0, %s93
      %s95 = sphi 0, %s93
      %s96 = sphi 0, %s95
      %s110 = sphi 0, %s96
      %s116 = sphi 0, %s118
      %s119 = sphi 0, %s116
      %s120 = sphi 0, %s119
      %s136 = sphi 0, %s120
    $region4: #{tpu_custom_call.1} parent=1 // loop_header_branch
      %20 = sbr.rel (%p18) target = $region8
    $region5: #{tpu_custom_call.1} parent=1 // loop_body
      %s22 = ssub.s32 %s17, 1
      %s23 = ssub.s32 %s17, 2
      %s24 = sadd.s32 %s17, 1
      %s25 = ssub.s32 %s17, %s24
      %p26 = scmp.eq.s32.totalorder %s25, 0
      %s28 = sadd.s32 %s27, 1
      %s29 = scalar_select %p26, %s27, %s28
      %p32 = pneg %p26
      %p33 = scmp.eq.s32.totalorder %s17, 1
      %p34 = por %p32, %p33
      %p35 = scmp.ne.s32.totalorder %s27, %s30
      %p36 = scmp.eq.s32.totalorder %s17, 0
      %p37 = por %p35, %p36
      %p38 = scmp.ne.s32.totalorder %s27, %s30
      %p39 = scmp.eq.s32.totalorder %s22, 1
      %p40 = por %p38, %p39
      %p41 = scmp.ne.s32.totalorder %s30, %s31
      %p42 = scmp.eq.s32.totalorder %s22, 0
      %p43 = por %p41, %p42
      %p44 = scmp.ne.s32.totalorder %s30, %s31
      %p45 = scmp.eq.s32.totalorder %s23, 1
      %p46 = por %p44, %p45
      %p48 = scmp.ne.s32.totalorder %s31, %s47
      %p49 = scmp.eq.s32.totalorder %s23, 0
      %p50 = por %p48, %p49
      %s52 = sadd.s32 %s51, 1
      %p55 = scmp.eq.s32.totalorder %s17, 1
      %p56 = scmp.ne.s32.totalorder %s51, %s53
      %p57 = scmp.eq.s32.totalorder %s17, 0
      %p58 = por %p56, %p57
      %p59 = scmp.ne.s32.totalorder %s51, %s53
      %p60 = scmp.eq.s32.totalorder %s22, 1
      %p61 = por %p59, %p60
      %p62 = scmp.ne.s32.totalorder %s53, %s54
      %p63 = scmp.eq.s32.totalorder %s22, 0
      %p64 = por %p62, %p63
      %p65 = scmp.ne.s32.totalorder %s53, %s54
      %p66 = scmp.eq.s32.totalorder %s23, 1
      %p67 = por %p65, %p66
      %p69 = scmp.ne.s32.totalorder %s54, %s68
      %p70 = scmp.eq.s32.totalorder %s23, 0
      %p71 = por %p69, %p70
      %s73 = sadd.s32 %s72, 1
      %p76 = scmp.eq.s32.totalorder %s17, 1
      %p77 = scmp.ne.s32.totalorder %s72, %s74
      %p78 = scmp.eq.s32.totalorder %s17, 0
      %p79 = por %p77, %p78
      %p80 = scmp.ne.s32.totalorder %s72, %s74
      %p81 = scmp.eq.s32.totalorder %s22, 1
      %p82 = por %p80, %p81
      %p83 = scmp.ne.s32.totalorder %s74, %s75
      %p84 = scmp.eq.s32.totalorder %s22, 0
      %p85 = por %p83, %p84
      %p86 = scmp.ne.s32.totalorder %s74, %s75
      %p87 = scmp.eq.s32.totalorder %s23, 1
      %p88 = por %p86, %p87
      %p90 = scmp.ne.s32.totalorder %s75, %s89
      %p91 = scmp.eq.s32.totalorder %s23, 0
      %p92 = por %p90, %p91
      %s94 = sadd.s32 %s93, 1
      %p97 = scmp.eq.s32.totalorder %s17, 1
      %p98 = scmp.ne.s32.totalorder %s93, %s95
      %p99 = scmp.eq.s32.totalorder %s17, 0
      %p100 = por %p98, %p99
      %p101 = scmp.ne.s32.totalorder %s93, %s95
      %p102 = scmp.eq.s32.totalorder %s22, 1
      %p103 = por %p101, %p102
      %p104 = scmp.ne.s32.totalorder %s95, %s96
      %p105 = scmp.eq.s32.totalorder %s22, 0
      %p106 = por %p104, %p105
      %p107 = scmp.ne.s32.totalorder %s95, %s96
      %p108 = scmp.eq.s32.totalorder %s23, 1
      %p109 = por %p107, %p108
      %p111 = scmp.ne.s32.totalorder %s96, %s110
      %p112 = scmp.eq.s32.totalorder %s23, 0
      %p113 = por %p111, %p112
      %s114 = ssub.s32 %s17, %s24
      %p115 = scmp.eq.s32.totalorder %s114, 0
      %s117 = sadd.s32 %s116, 1
      %s118 = scalar_select %p115, %s116, %s117
      %p121 = pneg %p115
      %p122 = scmp.eq.s32.totalorder %s17, 1
      %p123 = por %p121, %p122
      %p124 = scmp.ne.s32.totalorder %s116, %s119
      %p125 = scmp.eq.s32.totalorder %s17, 0
      %p126 = por %p124, %p125
      %p127 = scmp.ne.s32.totalorder %s116, %s119
      %p128 = scmp.eq.s32.totalorder %s22, 1
      %p129 = por %p127, %p128
      %p130 = scmp.ne.s32.totalorder %s119, %s120
      %p131 = scmp.eq.s32.totalorder %s22, 0
      %p132 = por %p130, %p131
      %p133 = scmp.ne.s32.totalorder %s119, %s120
      %p134 = scmp.eq.s32.totalorder %s23, 1
      %p135 = por %p133, %p134
      %p137 = scmp.ne.s32.totalorder %s120, %s136
      %p138 = scmp.eq.s32.totalorder %s23, 0
      %p139 = por %p137, %p138
      %p140 = scmp.le.s32.totalorder 1, %s17
      %p141 = scmp.lt.s32.totalorder %s17, 3
      %p142 = pnand %p140, %p141
      %p143 = pneg %p142
      // Predicated region
      $region9: #{tpu_custom_call.1} parent=5 // pred_check
        _
      $region10: #{tpu_custom_call.1} parent=5 // pred_check_branch
        %145 = sbr.rel (%p142) target = $region12
      $region11: #{tpu_custom_call.1} parent=5 // pred_region
        %s146 = ssub.s32 %s17, 1
        // Predicated region
        $region13: #{tpu_custom_call.1} parent=11 // pred_check
          %p147 = pneg %p64
        $region14: #{tpu_custom_call.1} parent=11 // pred_check_branch
          %149 = sbr.rel (%p147) target = $region16
        $region15: #{tpu_custom_call.1} parent=11 // pred_region
          %s151 = ssub.s32 512, 512
          %152 = vsyncadd [#allocation9], %s151
          %s153 = sshll.u32 [#allocation8], 4
          %s154 = int_to_ptr.vmem [resolvable:$true] %s153
          %159 = dma.hbm_to_vmem [thread:$0]  %s1, 512, %s154, [#allocation9], 128, 128, 8
        $region16: #{tpu_custom_call.1} parent=11 // pred_fallthru
          _
        // Predicated region
        $region17: #{tpu_custom_call.1} parent=11 // pred_check
          %p160 = pneg %p85
        $region18: #{tpu_custom_call.1} parent=11 // pred_check_branch
          %162 = sbr.rel (%p160) target = $region20
        $region19: #{tpu_custom_call.1} parent=11 // pred_region
          _
        $region20: #{tpu_custom_call.1} parent=11 // pred_fallthru
          _
        // Predicated region
        $region21: #{tpu_custom_call.1} parent=11 // pred_check
          %p163 = pneg %p106
        $region22: #{tpu_custom_call.1} parent=11 // pred_check_branch
          %165 = sbr.rel (%p163) target = $region24
        $region23: #{tpu_custom_call.1} parent=11 // pred_region
          %s167 = ssub.s32 512, 512
          %168 = vsyncadd [#allocation9], %s167
          %s169 = sshll.u32 [#allocation10], 4
          %s170 = int_to_ptr.vmem [resolvable:$true] %s169
          %175 = dma.hbm_to_vmem [thread:$0]  %s3, 512, %s170, [#allocation9], 256, 256, 16
        $region24: #{tpu_custom_call.1} parent=11 // pred_fallthru
          _
      $region12: #{tpu_custom_call.1} parent=5 // pred_fallthru
        _
      %p176 = scmp.lt.s32.totalorder %s17, 2
      // Predicated region
      $region25: #{tpu_custom_call.1} parent=5 // pred_check
        %p177 = pneg %p176
      $region26: #{tpu_custom_call.1} parent=5 // pred_check_branch
        %179 = sbr.rel (%p177) target = $region28
      $region27: #{tpu_custom_call.1} parent=5 // pred_region
        // Predicated region
        $region29: #{tpu_custom_call.1} parent=27 // pred_check
          %p180 = pneg %p37
        $region30: #{tpu_custom_call.1} parent=27 // pred_check_branch
          %182 = sbr.rel (%p180) target = $region32
        $region31: #{tpu_custom_call.1} parent=27 // pred_region
          %s183 = sand.u32 %s27, 1
          %s184 = scalar_lea.sflag [#allocation6], %s183
          %s185 = sand.u32 %s27, 1
          %s186 = smul.addr %s185, 8
          %s187 = scalar_lea.vmem [#allocation5], %s186
          %s189 = ssub.s32 128, 128
          %190 = vsyncadd %s184, %s189
          %s191 = smul.addr %s17, 2
          %s192 = smul.addr %s191, 64
          %s193 = scalar_lea.hbm %s0, %s192
          %s195 = sshll.u32 %s187, 4
          %s196 = int_to_ptr.vmem [resolvable:$true] %s195
          %198 = dma.hbm_to_vmem [thread:$0]  %s193, 128, %s196, %s184
        $region32: #{tpu_custom_call.1} parent=27 // pred_fallthru
          _
      $region28: #{tpu_custom_call.1} parent=5 // pred_fallthru
        _
      %p199 = scmp.le.s32.totalorder 1, %s17
      %p200 = scmp.lt.s32.totalorder %s17, 3
      %p201 = pnand %p199, %p200
      %p202 = pneg %p201
      // Predicated region
      $region33: #{tpu_custom_call.1} parent=5 // pred_check
        _
      $region34: #{tpu_custom_call.1} parent=5 // pred_check_branch
        %204 = sbr.rel (%p201) target = $region36
      $region35: #{tpu_custom_call.1} parent=5 // pred_region
        %s205 = ssub.s32 %s17, 1
        %s206 = sand.u32 %s30, 1
        %s207 = scalar_lea.sflag [#allocation6], %s206
        %s208 = sand.u32 %s30, 1
        %s209 = smul.addr %s208, 8
        %s210 = scalar_lea.vmem [#allocation5], %s209
        // Predicated region
        $region37: #{tpu_custom_call.1} parent=35 // pred_check
          %p211 = pneg %p43
        $region38: #{tpu_custom_call.1} parent=35 // pred_check_branch
          %213 = sbr.rel (%p211) target = $region40
        $region39: #{tpu_custom_call.1} parent=35 // pred_region
          %214 = dma.done %s207, 128
        $region40: #{tpu_custom_call.1} parent=35 // pred_fallthru
          _
        // Predicated region
        $region41: #{tpu_custom_call.1} parent=35 // pred_check
          %p215 = pneg %p64
        $region42: #{tpu_custom_call.1} parent=35 // pred_check_branch
          %217 = sbr.rel (%p215) target = $region44
        $region43: #{tpu_custom_call.1} parent=35 // pred_region
          %218 = dma.done [#allocation9], 512
        $region44: #{tpu_custom_call.1} parent=35 // pred_fallthru
          _
        // Predicated region
        $region45: #{tpu_custom_call.1} parent=35 // pred_check
          %p219 = pneg %p106
        $region46: #{tpu_custom_call.1} parent=35 // pred_check_branch
          %221 = sbr.rel (%p219) target = $region48
        $region47: #{tpu_custom_call.1} parent=35 // pred_region
          %222 = dma.done [#allocation9], 512
        $region48: #{tpu_custom_call.1} parent=35 // pred_fallthru
          _
        %s223 = sand.u32 %s30, 1
        %s224 = scalar_lea.sflag [#allocation6], %s223
        %s225 = sand.u32 %s30, 1
        %s226 = smul.addr %s225, 8
        %s227 = scalar_lea.vmem [#allocation5], %s226
        %p228 = pneg %p43
        %p229 = pneg %p40
        %p230 = pneg %p64
        %p231 = pneg %p61
        %p232 = pneg %p85
        %p233 = pneg %p82
        %p234 = pneg %p106
        %p235 = pneg %p103
        %p236 = pneg %p132
        %p237 = pneg %p129
        %s238 = sand.u32 %s119, 1
        %s239 = scalar_lea.sflag [#allocation7], %s238
        %s240 = sand.u32 %s119, 1
        %s241 = smul.addr %s240, 8
        %s242 = scalar_lea.vmem [#allocation11], %s241
        %243 = vst [vmem:[#allocation2] sm:$0xff] 0.0
        %244 = vst [vmem:[#allocation2 + $0x18] sm:$0xff] 0.0
        %245 = vst [vmem:[#allocation2] sm:$0xf0] 0.0
        %246 = vst [vmem:[#allocation2 + $0x8] sm:$0xf0] 0.0
        %247 = vst [vmem:[#allocation2 + $0x10] sm:$0xf0] 0.0
        %248 = vst [vmem:[#allocation2 + $0x18] sm:$0xf0] 0.0
        %v249 = vld [vmem:[%s210] sm:$0xff]
        %v250 = vmax.f32 %v249, 0.0
        %v252 = vcombine.high %v250, %v250
        %254 = vst [vmem:[#allocation2 + $0x8] sm:$0xf] %v250
        %255 = vst [vmem:[#allocation2 + $0x10] sm:$0xf] %v252
        %v256 = vld [vmem:[#allocation2] sm:$0xff]
        %v257 = vld [vmem:[#allocation2 + $0x8] sm:$0xff]
        %v258 = vld [vmem:[#allocation2 + $0x10] sm:$0xff]
        %v259 = vld [vmem:[#allocation10] ss:$8 sm:$0x3]
        %v261 = vlaneseq
        %v262 = vshrl.u32 %v261, 7
        %v263 = vsub.s32 0, %v262
        %v264 = vrot.slane %v259, %v263
        %v265 = vlaneseq
        %v266 = vshrl.u32 %v265, 7
        %v267 = vsub.s32 1, %v266
        %v268 = vrot.slane %v259, %v267
        %269 = vrot.lane.b32.xlu0 %v264, 111
        %v270 = vpop.permute.xlu0 %269
        %271 = vrot.lane.b32.xlu0 %v268, 111
        %v272 = vpop.permute.xlu0 %271
        %vm273 = vcmask 908288
        %v274 = vsel %vm273, %v270, %v272
        %v278 = vmul.f32 %v256, %v270
        %v279 = vmul.f32 %v257, %v274
        %v280 = vmul.f32 %v258, %v272
        %284 = vrot.lane.b32.xlu0 %v278, 17
        %v285 = vpop.permute.xlu0 %284
        %286 = vrot.lane.b32.xlu0 %v279, 17
        %v287 = vpop.permute.xlu0 %286
        %288 = vrot.lane.b32.xlu0 %v280, 17
        %v289 = vpop.permute.xlu0 %288
        %vm290 = vcmask 138240
        %v291 = vsel %vm290, %v285, %v287
        %v292 = vsel %vm290, %v287, %v289
        %295 = vst [vmem:[#allocation3] sm:$0xff] %v291
        %296 = vst [vmem:[#allocation3 + $0x8] sm:$0xff] %v292
        %v297 = vld [vmem:[#allocation2] sm:$0xff]
        %v298 = vld [vmem:[#allocation2 + $0x8] sm:$0xff]
        %v299 = vld [vmem:[#allocation2 + $0x10] sm:$0xff]
        %s300 = scalar_lea.vmem [#allocation10], 1
        %v301 = vld [vmem:[%s300] ss:$8 sm:$0x3]
        %v303 = vlaneseq
        %v304 = vshrl.u32 %v303, 7
        %v305 = vsub.s32 0, %v304
        %v306 = vrot.slane %v301, %v305
        %v307 = vlaneseq
        %v308 = vshrl.u32 %v307, 7
        %v309 = vsub.s32 1, %v308
        %v310 = vrot.slane %v301, %v309
        %311 = vrot.lane.b32.xlu0 %v306, 112
        %v312 = vpop.permute.xlu0 %311
        %313 = vrot.lane.b32.xlu0 %v310, 112
        %v314 = vpop.permute.xlu0 %313
        %vm315 = vcmask 916480
        %v316 = vsel %vm315, %v312, %v314
        %v320 = vmul.f32 %v297, %v312
        %v321 = vmul.f32 %v298, %v316
        %v322 = vmul.f32 %v299, %v314
        %326 = vrot.lane.b32.xlu0 %v320, 16
        %v327 = vpop.permute.xlu0 %326
        %328 = vrot.lane.b32.xlu0 %v321, 16
        %v329 = vpop.permute.xlu0 %328
        %330 = vrot.lane.b32.xlu0 %v322, 16
        %v331 = vpop.permute.xlu0 %330
        %vm332 = vcmask 130048
        %v333 = vsel %vm332, %v327, %v329
        %v334 = vsel %vm332, %v329, %v331
        %337 = vst [vmem:[#allocation3 + $0x10] sm:$0xff] %v333
        %338 = vst [vmem:[#allocation3 + $0x18] sm:$0xff] %v334
        %v339 = vld [vmem:[#allocation2] sm:$0xff]
        %v340 = vld [vmem:[#allocation2 + $0x8] sm:$0xff]
        %v341 = vld [vmem:[#allocation2 + $0x10] sm:$0xff]
        %s342 = scalar_lea.vmem [#allocation10], 2
        %v343 = vld [vmem:[%s342] ss:$8 sm:$0x3]
        %v345 = vlaneseq
        %v346 = vshrl.u32 %v345, 7
        %v347 = vsub.s32 0, %v346
        %v348 = vrot.slane %v343, %v347
        %v349 = vlaneseq
        %v350 = vshrl.u32 %v349, 7
        %v351 = vsub.s32 1, %v350
        %v352 = vrot.slane %v343, %v351
        %353 = vrot.lane.b32.xlu0 %v348, 113
        %v354 = vpop.permute.xlu0 %353
        %355 = vrot.lane.b32.xlu0 %v352, 113
        %v356 = vpop.permute.xlu0 %355
        %vm357 = vcmask 924672
        %v358 = vsel %vm357, %v354, %v356
        %v362 = vmul.f32 %v339, %v354
        %v363 = vmul.f32 %v340, %v358
        %v364 = vmul.f32 %v341, %v356
        %368 = vrot.lane.b32.xlu0 %v362, 15
        %v369 = vpop.permute.xlu0 %368
        %370 = vrot.lane.b32.xlu0 %v363, 15
        %v371 = vpop.permute.xlu0 %370
        %372 = vrot.lane.b32.xlu0 %v364, 15
        %v373 = vpop.permute.xlu0 %372
        %vm374 = vcmask 121856
        %v375 = vsel %vm374, %v369, %v371
        %v376 = vsel %vm374, %v371, %v373
        %379 = vst [vmem:[#allocation3 + $0x20] sm:$0xff] %v375
        %380 = vst [vmem:[#allocation3 + $0x28] sm:$0xff] %v376
        %v381 = vld [vmem:[#allocation2] sm:$0xff]
        %v382 = vld [vmem:[#allocation2 + $0x8] sm:$0xff]
        %v383 = vld [vmem:[#allocation2 + $0x10] sm:$0xff]
        %s384 = scalar_lea.vmem [#allocation10], 3
        %v385 = vld [vmem:[%s384] ss:$8 sm:$0x3]
        %v387 = vlaneseq
        %v388 = vshrl.u32 %v387, 7
        %v389 = vsub.s32 0, %v388
        %v390 = vrot.slane %v385, %v389
        %v391 = vlaneseq
        %v392 = vshrl.u32 %v391, 7
        %v393 = vsub.s32 1, %v392
        %v394 = vrot.slane %v385, %v393
        %395 = vrot.lane.b32.xlu0 %v390, 127
        %v396 = vpop.permute.xlu0 %395
        %397 = vrot.lane.b32.xlu0 %v394, 127
        %v398 = vpop.permute.xlu0 %397
        %vm399 = vcmask 1039360
        %v400 = vsel %vm399, %v396, %v398
        %v404 = vmul.f32 %v381, %v396
        %v405 = vmul.f32 %v382, %v400
        %v406 = vmul.f32 %v383, %v398
        %410 = vrot.lane.b32.xlu0 %v404, 1
        %v411 = vpop.permute.xlu0 %410
        %412 = vrot.lane.b32.xlu0 %v405, 1
        %v413 = vpop.permute.xlu0 %412
        %414 = vrot.lane.b32.xlu0 %v406, 1
        %v415 = vpop.permute.xlu0 %414
        %vm416 = vcmask 7168
        %v417 = vsel %vm416, %v411, %v413
        %v418 = vsel %vm416, %v413, %v415
        %421 = vst [vmem:[#allocation3 + $0x30] sm:$0xff] %v417
        %422 = vst [vmem:[#allocation3 + $0x38] sm:$0xff] %v418
        %v423 = vld [vmem:[#allocation2 + $0x8] sm:$0xff]
        %v424 = vld [vmem:[#allocation2 + $0x10] sm:$0xff]
        %425 = vst [vmem:[#allocation3 + $0x40] sm:$0xff] %v423
        %426 = vst [vmem:[#allocation3 + $0x48] sm:$0xff] %v424
        %v427 = vld [vmem:[#allocation2 + $0x8] sm:$0xff]
        %v428 = vld [vmem:[#allocation2 + $0x10] sm:$0xff]
        %v429 = vld [vmem:[#allocation2 + $0x18] sm:$0xff]
        %s430 = scalar_lea.vmem [#allocation10], 5
        %v431 = vld [vmem:[%s430] ss:$8 sm:$0x3]
        %v433 = vlaneseq
        %v434 = vshrl.u32 %v433, 7
        %v435 = vsub.s32 0, %v434
        %v436 = vrot.slane %v431, %v435
        %v437 = vlaneseq
        %v438 = vshrl.u32 %v437, 7
        %v439 = vsub.s32 1, %v438
        %v440 = vrot.slane %v431, %v439
        %441 = vrot.lane.b32.xlu0 %v436, 1
        %v442 = vpop.permute.xlu0 %441
        %443 = vrot.lane.b32.xlu0 %v440, 1
        %v444 = vpop.permute.xlu0 %443
        %v445 = vsel %vm416, %v442, %v444
        %v449 = vmul.f32 %v427, %v442
        %v450 = vmul.f32 %v428, %v445
        %v451 = vmul.f32 %v429, %v444
        %455 = vrot.lane.b32.xlu0 %v449, 127
        %v456 = vpop.permute.xlu0 %455
        %457 = vrot.lane.b32.xlu0 %v450, 127
        %v458 = vpop.permute.xlu0 %457
        %459 = vrot.lane.b32.xlu0 %v451, 127
        %v460 = vpop.permute.xlu0 %459
        %v461 = vsel %vm399, %v456, %v458
        %v462 = vsel %vm399, %v458, %v460
        %465 = vst [vmem:[#allocation3 + $0x50] sm:$0xff] %v461
        %466 = vst [vmem:[#allocation3 + $0x58] sm:$0xff] %v462
        %v467 = vld [vmem:[#allocation2 + $0x8] sm:$0xff]
        %v468 = vld [vmem:[#allocation2 + $0x10] sm:$0xff]
        %v469 = vld [vmem:[#allocation2 + $0x18] sm:$0xff]
        %s470 = scalar_lea.vmem [#allocation10], 6
        %v471 = vld [vmem:[%s470] ss:$8 sm:$0x3]
        %v473 = vlaneseq
        %v474 = vshrl.u32 %v473, 7
        %v475 = vsub.s32 0, %v474
        %v476 = vrot.slane %v471, %v475
        %v477 = vlaneseq
        %v478 = vshrl.u32 %v477, 7
        %v479 = vsub.s32 1, %v478
        %v480 = vrot.slane %v471, %v479
        %481 = vrot.lane.b32.xlu0 %v476, 15
        %v482 = vpop.permute.xlu0 %481
        %483 = vrot.lane.b32.xlu0 %v480, 15
        %v484 = vpop.permute.xlu0 %483
        %v485 = vsel %vm374, %v482, %v484
        %v489 = vmul.f32 %v467, %v482
        %v490 = vmul.f32 %v468, %v485
        %v491 = vmul.f32 %v469, %v484
        %495 = vrot.lane.b32.xlu0 %v489, 113
        %v496 = vpop.permute.xlu0 %495
        %497 = vrot.lane.b32.xlu0 %v490, 113
        %v498 = vpop.permute.xlu0 %497
        %499 = vrot.lane.b32.xlu0 %v491, 113
        %v500 = vpop.permute.xlu0 %499
        %v501 = vsel %vm357, %v496, %v498
        %v502 = vsel %vm357, %v498, %v500
        %505 = vst [vmem:[#allocation3 + $0x60] sm:$0xff] %v501
        %506 = vst [vmem:[#allocation3 + $0x68] sm:$0xff] %v502
        %v507 = vld [vmem:[#allocation2 + $0x8] sm:$0xff]
        %v508 = vld [vmem:[#allocation2 + $0x10] sm:$0xff]
        %v509 = vld [vmem:[#allocation2 + $0x18] sm:$0xff]
        %s510 = scalar_lea.vmem [#allocation10], 7
        %v511 = vld [vmem:[%s510] ss:$8 sm:$0x3]
        %v513 = vlaneseq
        %v514 = vshrl.u32 %v513, 7
        %v515 = vsub.s32 0, %v514
        %v516 = vrot.slane %v511, %v515
        %v517 = vlaneseq
        %v518 = vshrl.u32 %v517, 7
        %v519 = vsub.s32 1, %v518
        %v520 = vrot.slane %v511, %v519
        %521 = vrot.lane.b32.xlu0 %v516, 16
        %v522 = vpop.permute.xlu0 %521
        %523 = vrot.lane.b32.xlu0 %v520, 16
        %v524 = vpop.permute.xlu0 %523
        %v525 = vsel %vm332, %v522, %v524
        %v529 = vmul.f32 %v507, %v522
        %v530 = vmul.f32 %v508, %v525
        %v531 = vmul.f32 %v509, %v524
        %535 = vrot.lane.b32.xlu0 %v529, 112
        %v536 = vpop.permute.xlu0 %535
        %537 = vrot.lane.b32.xlu0 %v530, 112
        %v538 = vpop.permute.xlu0 %537
        %539 = vrot.lane.b32.xlu0 %v531, 112
        %v540 = vpop.permute.xlu0 %539
        %v541 = vsel %vm315, %v536, %v538
        %v542 = vsel %vm315, %v538, %v540
        %545 = vst [vmem:[#allocation3 + $0x70] sm:$0xff] %v541
        %546 = vst [vmem:[#allocation3 + $0x78] sm:$0xff] %v542
        %v547 = vld [vmem:[#allocation2 + $0x8] sm:$0xff]
        %v548 = vld [vmem:[#allocation2 + $0x10] sm:$0xff]
        %v549 = vld [vmem:[#allocation2 + $0x18] sm:$0xff]
        %s550 = scalar_lea.vmem [#allocation10], 16
        %v551 = vld [vmem:[%s550] ss:$8 sm:$0x3]
        %v553 = vlaneseq
        %v554 = vshrl.u32 %v553, 7
        %v555 = vsub.s32 0, %v554
        %v556 = vrot.slane %v551, %v555
        %v557 = vlaneseq
        %v558 = vshrl.u32 %v557, 7
        %v559 = vsub.s32 1, %v558
        %v560 = vrot.slane %v551, %v559
        %561 = vrot.lane.b32.xlu0 %v556, 17
        %v562 = vpop.permute.xlu0 %561
        %563 = vrot.lane.b32.xlu0 %v560, 17
        %v564 = vpop.permute.xlu0 %563
        %v565 = vsel %vm290, %v562, %v564
        %v569 = vmul.f32 %v547, %v562
        %v570 = vmul.f32 %v548, %v565
        %v571 = vmul.f32 %v549, %v564
        %575 = vrot.lane.b32.xlu0 %v569, 111
        %v576 = vpop.permute.xlu0 %575
        %577 = vrot.lane.b32.xlu0 %v570, 111
        %v578 = vpop.permute.xlu0 %577
        %579 = vrot.lane.b32.xlu0 %v571, 111
        %v580 = vpop.permute.xlu0 %579
        %v581 = vsel %vm273, %v576, %v578
        %v582 = vsel %vm273, %v578, %v580
        %585 = vst [vmem:[#allocation3 + $0x80] sm:$0xff] %v581
        %586 = vst [vmem:[#allocation3 + $0x88] sm:$0xff] %v582
        %v587 = vld [vmem:[#allocation8] sm:$0xff]
        %v588 = vld [vmem:[#allocation8 + $0x8] sm:$0xff]
        %v589 = vld [vmem:[#allocation8 + $0x10] sm:$0xff]
        %v590 = vld [vmem:[#allocation8 + $0x18] sm:$0xff]
        %v591 = vld [vmem:[#allocation3] sm:$0xff]
        %v592 = vld [vmem:[#allocation3 + $0x8] sm:$0xff]
        %v593 = vld [vmem:[#allocation3 + $0x10] sm:$0xff]
        %v594 = vld [vmem:[#allocation3 + $0x18] sm:$0xff]
        %v595 = vld [vmem:[#allocation3 + $0x20] sm:$0xff]
        %v596 = vld [vmem:[#allocation3 + $0x28] sm:$0xff]
        %v597 = vld [vmem:[#allocation3 + $0x30] sm:$0xff]
        %v598 = vld [vmem:[#allocation3 + $0x38] sm:$0xff]
        %v599 = vld [vmem:[#allocation3 + $0x40] sm:$0xff]
        %v600 = vld [vmem:[#allocation3 + $0x48] sm:$0xff]
        %v601 = vld [vmem:[#allocation3 + $0x50] sm:$0xff]
        %v602 = vld [vmem:[#allocation3 + $0x58] sm:$0xff]
        %v603 = vld [vmem:[#allocation3 + $0x60] sm:$0xff]
        %v604 = vld [vmem:[#allocation3 + $0x68] sm:$0xff]
        %v605 = vld [vmem:[#allocation3 + $0x70] sm:$0xff]
        %v606 = vld [vmem:[#allocation3 + $0x78] sm:$0xff]
        %v607 = vld [vmem:[#allocation3 + $0x80] sm:$0xff]
        %v608 = vld [vmem:[#allocation3 + $0x88] sm:$0xff]
        %vm609 = vcmask 588800
        %v611 = vsel %vm609, %v587, 0
        %v614 = vsel %vm609, %v588, 0
        %v617 = vsel %vm609, %v589, 0
        %v620 = vsel %vm609, %v590, 0
        %622 = vmatprep.subr.mxu0 %v592
        %623 = vmatpush1.msra.mxu0 %v591
        %624 = vmatprep.subr.mxu0 %v594
        %625 = vmatpush1.msra.mxu0 %v593
        %626 = vmatprep.subr.mxu0 %v596
        %627 = vmatpush1.msra.mxu0 %v595
        %628 = vmatprep.subr.mxu0 %v598
        %629 = vmatpush1.msra.mxu0 %v597
        %630 = vmatprep.subr.mxu0 %v600
        %631 = vmatpush1.msra.mxu0 %v599
        %632 = vmatprep.subr.mxu0 %v602
        %633 = vmatpush1.msra.mxu0 %v601
        %634 = vmatprep.subr.mxu0 %v604
        %635 = vmatpush1.msra.mxu0 %v603
        %636 = vmatprep.subr.mxu0 %v606
        %637 = vmatpush1.msra.mxu0 %v605
        %638 = vmatprep.subr.mxu0 %v608
        %639 = vmatpush1.msra.mxu0 %v607
        %640 = vmatprep.subr.mxu0 0.0
        %641 = vmatpush1.msra.mxu0 0.0
        %642 = vmatprep.subr.mxu0 0.0
        %643 = vmatpush1.msra.mxu0 0.0
        %644 = vmatprep.subr.mxu0 0.0
        %645 = vmatpush1.msra.mxu0 0.0
        %646 = vmatprep.subr.mxu0 0.0
        %647 = vmatpush1.msra.mxu0 0.0
        %648 = vmatprep.subr.mxu0 0.0
        %649 = vmatpush1.msra.mxu0 0.0
        %650 = vmatprep.subr.mxu0 0.0
        %651 = vmatpush1.msra.mxu0 0.0
        %652 = vmatprep.subr.mxu0 0.0
        %653 = vmatpush1.msra.mxu0 0.0
        %654 = vmatprep.subr.mxu0 0.0
        %655 = vmatpush1.msra.mxu0 0.0
        %656 = vmatprep.subr.mxu0 0.0
        %657 = vmatpush1.msra.mxu0 0.0
        %658 = vmatprep.subr.mxu0 0.0
        %659 = vmatpush1.msra.mxu0 0.0
        %660 = vmatprep.subr.mxu0 0.0
        %661 = vmatpush1.msra.mxu0 0.0
        %662 = vmatprep.subr.mxu0 0.0
        %663 = vmatpush1.msra.mxu0 0.0
        %664 = vmatprep.subr.mxu0 0.0
        %665 = vmatpush1.msra.mxu0 0.0
        %666 = vmatprep.subr.mxu0 0.0
        %667 = vmatpush1.msra.mxu0 0.0
        %668 = vmatprep.subr.mxu0 0.0
        %669 = vmatpush1.msra.mxu0 0.0
        %670 = vmatprep.subr.mxu0 0.0
        %671 = vmatpush1.msra.mxu0 0.0
        %672 = vmatprep.subr.mxu0 0.0
        %673 = vmatpush1.msra.mxu0 0.0
        %674 = vmatprep.subr.mxu0 0.0
        %675 = vmatpush1.msra.mxu0 0.0
        %676 = vmatprep.subr.mxu0 0.0
        %677 = vmatpush1.msra.mxu0 0.0
        %678 = vmatprep.subr.mxu0 0.0
        %679 = vmatpush1.msra.mxu0 0.0
        %680 = vmatprep.subr.mxu0 0.0
        %681 = vmatpush1.msra.mxu0 0.0
        %682 = vmatprep.subr.mxu0 0.0
        %683 = vmatpush1.msra.mxu0 0.0
        %684 = vmatprep.subr.mxu0 0.0
        %685 = vmatpush1.msra.mxu0 0.0
        %686 = vmatprep.mubr.f32.mxu0 0.0
        %687 = vmatmul.mubr.f32.gmra.mrb[0].mxu0 %v611
        %v688 = vpop.f32.mrb[0].mxu0
        %v689 = vadd.f32 0.0, %v688
        %v690 = vpop.f32.mrb[0].mxu0
        %v691 = vadd.f32 0.0, %v690
        %692 = vmatprep.mubr.f32.mxu0 0.0
        %693 = vmatmul.mubr.f32.gmra.mrb[0].mxu0 %v614
        %v694 = vpop.f32.mrb[0].mxu0
        %v695 = vadd.f32 0.0, %v694
        %v696 = vpop.f32.mrb[0].mxu0
        %v697 = vadd.f32 0.0, %v696
        %698 = vmatprep.mubr.f32.mxu0 0.0
        %699 = vmatmul.mubr.f32.gmra.mrb[0].mxu0 %v617
        %v700 = vpop.f32.mrb[0].mxu0
        %v701 = vadd.f32 0.0, %v700
        %v702 = vpop.f32.mrb[0].mxu0
        %v703 = vadd.f32 0.0, %v702
        %704 = vmatprep.mubr.f32.mxu0 0.0
        %705 = vmatmul.mubr.f32.gmra.mrb[0].mxu0 %v620
        %v706 = vpop.f32.mrb[0].mxu0
        %v707 = vadd.f32 0.0, %v706
        %v708 = vpop.f32.mrb[0].mxu0
        %v709 = vadd.f32 0.0, %v708
        %710 = vdwg.mxu0
        %v711 = vmax.f32 %v689, 0.0
        %v712 = vmax.f32 %v691, 0.0
        %v713 = vmax.f32 %v695, 0.0
        %v714 = vmax.f32 %v697, 0.0
        %v715 = vmax.f32 %v701, 0.0
        %v716 = vmax.f32 %v703, 0.0
        %v717 = vmax.f32 %v707, 0.0
        %v718 = vmax.f32 %v709, 0.0
        %v719 = vld [vmem:[%s2] sm:$0xf]
        %vm720 = vcmask 261120
        %v722 = vsel %vm720, %v719, 0
        %724 = vmatprep.subr.mxu0 %v712
        %725 = vmatpush1.msra.mxu0 %v711
        %726 = vmatprep.subr.mxu0 %v714
        %727 = vmatpush1.msra.mxu0 %v713
        %728 = vmatprep.subr.mxu0 %v716
        %729 = vmatpush1.msra.mxu0 %v715
        %730 = vmatprep.subr.mxu0 %v718
        %731 = vmatpush1.msra.mxu0 %v717
        %732 = vmatprep.subr.mxu0 0.0
        %733 = vmatpush1.msra.mxu0 0.0
        %734 = vmatprep.subr.mxu0 0.0
        %735 = vmatpush1.msra.mxu0 0.0
        %736 = vmatprep.subr.mxu0 0.0
        %737 = vmatpush1.msra.mxu0 0.0
        %738 = vmatprep.subr.mxu0 0.0
        %739 = vmatpush1.msra.mxu0 0.0
        %740 = vmatprep.subr.mxu0 0.0
        %741 = vmatpush1.msra.mxu0 0.0
        %742 = vmatprep.subr.mxu0 0.0
        %743 = vmatpush1.msra.mxu0 0.0
        %744 = vmatprep.subr.mxu0 0.0
        %745 = vmatpush1.msra.mxu0 0.0
        %746 = vmatprep.subr.mxu0 0.0
        %747 = vmatpush1.msra.mxu0 0.0
        %748 = vmatprep.subr.mxu0 0.0
        %749 = vmatpush1.msra.mxu0 0.0
        %750 = vmatprep.subr.mxu0 0.0
        %751 = vmatpush1.msra.mxu0 0.0
        %752 = vmatprep.subr.mxu0 0.0
        %753 = vmatpush1.msra.mxu0 0.0
        %754 = vmatprep.subr.mxu0 0.0
        %755 = vmatpush1.msra.mxu0 0.0
        %756 = vmatprep.subr.mxu0 0.0
        %757 = vmatpush1.msra.mxu0 0.0
        %758 = vmatprep.subr.mxu0 0.0
        %759 = vmatpush1.msra.mxu0 0.0
        %760 = vmatprep.subr.mxu0 0.0
        %761 = vmatpush1.msra.mxu0 0.0
        %762 = vmatprep.subr.mxu0 0.0
        %763 = vmatpush1.msra.mxu0 0.0
        %764 = vmatprep.subr.mxu0 0.0
        %765 = vmatpush1.msra.mxu0 0.0
        %766 = vmatprep.subr.mxu0 0.0
        %767 = vmatpush1.msra.mxu0 0.0
        %768 = vmatprep.subr.mxu0 0.0
        %769 = vmatpush1.msra.mxu0 0.0
        %770 = vmatprep.subr.mxu0 0.0
        %771 = vmatpush1.msra.mxu0 0.0
        %772 = vmatprep.subr.mxu0 0.0
        %773 = vmatpush1.msra.mxu0 0.0
        %774 = vmatprep.subr.mxu0 0.0
        %775 = vmatpush1.msra.mxu0 0.0
        %776 = vmatprep.subr.mxu0 0.0
        %777 = vmatpush1.msra.mxu0 0.0
        %778 = vmatprep.subr.mxu0 0.0
        %779 = vmatpush1.msra.mxu0 0.0
        %780 = vmatprep.subr.mxu0 0.0
        %781 = vmatpush1.msra.mxu0 0.0
        %782 = vmatprep.subr.mxu0 0.0
        %783 = vmatpush1.msra.mxu0 0.0
        %784 = vmatprep.subr.mxu0 0.0
        %785 = vmatpush1.msra.mxu0 0.0
        %786 = vmatprep.subr.mxu0 0.0
        %787 = vmatpush1.msra.mxu0 0.0
        %788 = vmatprep.mubr.f32.mxu0 0.0
        %789 = vmatmul.mubr.f32.gmra.mrb[0].mxu0 %v722
        %v790 = vpop.f32.mrb[0].mxu0
        %v791 = vadd.f32 0.0, %v790
        %v792 = vpop.f32.mrb[0].mxu0
        %v793 = vadd.f32 0.0, %v792
        %794 = vdwg.mxu0
        %v797 = vcombine.low %v791, %v793
        %799 = vst [vmem:[#allocation4] sm:$0xff] %v797
        %v800 = vld [vmem:[#allocation4] sm:$0xff]
        %v801 = vld [vmem:[%s210] sm:$0xff]
        %v802 = vadd.f32 %v800, %v801
        %803 = vst [vmem:[%s242] sm:$0xff] %v802
        %s804 = sand.u32 %s119, 1
        %s805 = scalar_lea.sflag [#allocation7], %s804
        %s806 = sand.u32 %s119, 1
        %s807 = smul.addr %s806, 8
        %s808 = scalar_lea.vmem [#allocation11], %s807
        // Predicated region
        $region49: #{tpu_custom_call.1} parent=35 // pred_check
          %p809 = pneg %p129
        $region50: #{tpu_custom_call.1} parent=35 // pred_check_branch
          %811 = sbr.rel (%p809) target = $region52
        $region51: #{tpu_custom_call.1} parent=35 // pred_region
          %s813 = ssub.s32 128, 128
          %814 = vsyncadd %s805, %s813
          %s815 = smul.addr %s22, 2
          %s816 = smul.addr %s815, 64
          %s817 = scalar_lea.hbm %s4, %s816
          %s819 = sshll.u32 %s808, 4
          %s820 = int_to_ptr.vmem [resolvable:$true] %s819
          %822 = dma.vmem_to_hbm [thread:$0]  %s820, 128, %s817, %s805
        $region52: #{tpu_custom_call.1} parent=35 // pred_fallthru
          _
      $region36: #{tpu_custom_call.1} parent=5 // pred_fallthru
        _
      %p823 = scmp.le.s32.totalorder 2, %s17
      // Predicated region
      $region53: #{tpu_custom_call.1} parent=5 // pred_check
        %p824 = pneg %p823
      $region54: #{tpu_custom_call.1} parent=5 // pred_check_branch
        %826 = sbr.rel (%p824) target = $region56
      $region55: #{tpu_custom_call.1} parent=5 // pred_region
        %s827 = ssub.s32 %s17, 2
        // Predicated region
        $region57: #{tpu_custom_call.1} parent=55 // pred_check
          %p828 = pneg %p135
        $region58: #{tpu_custom_call.1} parent=55 // pred_check_branch
          %830 = sbr.rel (%p828) target = $region60
        $region59: #{tpu_custom_call.1} parent=55 // pred_region
          %s831 = sand.u32 %s120, 1
          %s832 = scalar_lea.sflag [#allocation7], %s831
          %s833 = sand.u32 %s120, 1
          %s834 = smul.addr %s833, 8
          %s835 = scalar_lea.vmem [#allocation11], %s834
          %836 = dma.done %s832, 128
        $region60: #{tpu_custom_call.1} parent=55 // pred_fallthru
          _
      $region56: #{tpu_custom_call.1} parent=5 // pred_fallthru
        _
    $region6: #{tpu_custom_call.1} parent=1 // loop_footer
      %s21 = sadd.s32 1, %s17
    $region7: #{tpu_custom_call.1} parent=1 // loop_footer_branch
      %16 = sbr.rel target = $region3
    $region8: #{tpu_custom_call.1} parent=1 // loop_exit
      _
    %837 = vsyncpa [#allocation6], 1
    %s838 = scalar_lea.sflag [#allocation6], 1
    %839 = vsyncpa %s838, 1
    %840 = vsyncpa [#allocation9], 1
    %841 = vsyncpa [#allocation7], 1
    %s842 = scalar_lea.sflag [#allocation7], 1
    %843 = vsyncpa %s842, 1

</llo_original>
